<compile_context>
chip_gen: v7x
topology: tpu7x:2x2x1
jax: 0.10.0
libtpu: 0.0.40
codegen_flags: <defaults>
</compile_context>

<pallas_src>
import functools
import math

import jax
import jax.numpy as jnp
from jax import lax
from jax.experimental import pallas as pl
from jax.experimental.pallas import tpu as pltpu


def _round_up(x, m):
    return ((x + m - 1) // m) * m


# ----------------------------------------------------------------------------
# Fused Pallas kernel: encoders + fusion MLP + DEC soft assignment
# ----------------------------------------------------------------------------

def _conan_fused_kernel(*refs, n_views, alpha, k_valid, mm_dtype):
    # refs layout:
    #   x[v]        (bm, IN_v)        per view
    #   w_enc[v]    (IN_v, Hp)        bf16/f32
    #   b_enc[v]    (1, Hp)           f32
    #   w_f0[v]     (Hp, Hp)          per-view slice of fusion layer-0 weight
    #   b_f0        (1, Hp)
    #   w_f1        (Hp, Hp)
    #   b_f1        (1, Hp)
    #   centers     (Kp, Hp)          f32 (padded clusters are zero rows)
    #   csq         (1, Kp)           precomputed ||c||^2
    #   out         (bm, Kp)
    x_refs = refs[0:n_views]
    wenc_refs = refs[n_views:2 * n_views]
    benc_refs = refs[2 * n_views:3 * n_views]
    wf0_refs = refs[3 * n_views:4 * n_views]
    b_f0_ref, w_f1_ref, b_f1_ref, c_ref, csq_ref, o_ref = refs[4 * n_views:]

    # --- per-view encoders + accumulated first fusion matmul (concat folded away) ---
    acc = None
    for v in range(n_views):
        xv = x_refs[v][...].astype(mm_dtype)
        hv = jnp.dot(xv, wenc_refs[v][...], preferred_element_type=jnp.float32)
        hv = jnp.maximum(hv + benc_refs[v][...], 0.0)
        part = jnp.dot(hv.astype(mm_dtype), wf0_refs[v][...],
                       preferred_element_type=jnp.float32)
        acc = part if acc is None else acc + part

    z0 = jnp.maximum(acc + b_f0_ref[...], 0.0)                        # fusion layer 0 (ReLU)
    z = jnp.dot(z0.astype(mm_dtype), w_f1_ref[...],
                preferred_element_type=jnp.float32) + b_f1_ref[...]   # fusion layer 1 (Identity)

    # --- DEC soft assignment: ||z-c||^2 = ||z||^2 + ||c||^2 - 2 z.c^T (MXU) ---
    c = c_ref[...]                                                    # (Kp, Hp) f32
    z_sq = jnp.sum(z * z, axis=1, keepdims=True)                      # (bm, 1)
    cross = lax.dot_general(z, c, (((1,), (1,)), ((), ())),
                            preferred_element_type=jnp.float32)       # (bm, Kp)
    norm_sq = jnp.maximum(z_sq + csq_ref[...] - 2.0 * cross, 0.0)     # clamp cancellation

    num = pl.reciprocal(1.0 + norm_sq * (1.0 / alpha), approx=True)   # EUP
    power = (alpha + 1.0) / 2.0
    if power != 1.0:                                                  # alpha=1 -> power=1
        num = num ** power

    # mask out padded clusters before the normalization sum
    lane = lax.broadcasted_iota(jnp.int32, num.shape, 1)
    num = jnp.where(lane < k_valid, num, 0.0)
    denom = jnp.sum(num, axis=1, keepdims=True)
    o_ref[...] = (num / denom).astype(o_ref.dtype)                    # exact normalization


# ----------------------------------------------------------------------------
# Parameter initialization (deterministic, mirrors the PyTorch init scheme)
# ----------------------------------------------------------------------------

def _xavier_normal(key, fan_in, fan_out, gain):
    std = gain * math.sqrt(2.0 / (fan_in + fan_out))
    return std * jax.random.normal(key, (fan_in, fan_out), dtype=jnp.float32)


def _xavier_uniform(key, rows, cols):
    bound = math.sqrt(6.0 / (rows + cols))
    return jax.random.uniform(key, (rows, cols), dtype=jnp.float32,
                              minval=-bound, maxval=bound)


def init_params(key, *, input_channels, hidden_dim, num_cluster, views):
    gain = math.sqrt(2.0)  # CONAN.weights_init('xavier') -> xavier_normal_(gain=sqrt(2))
    keys = jax.random.split(key, 2 * views + 3)
    params = {"encoders": [], "fusion": [], "centers": None}

    for v in range(views):
        w = _xavier_normal(keys[v], input_channels[v], hidden_dim, gain)
        b = jnp.zeros((hidden_dim,), jnp.float32)
        params["encoders"].append({"w": w, "b": b})

    # FusionLayer: Linear(hidden*views, hidden)+ReLU, then Linear(hidden, hidden)+Identity
    w0 = _xavier_normal(keys[views], hidden_dim * views, hidden_dim, gain)
    w1 = _xavier_normal(keys[views + 1], hidden_dim, hidden_dim, gain)
    params["fusion"].append({"w": w0, "b": jnp.zeros((hidden_dim,), jnp.float32)})
    params["fusion"].append({"w": w1, "b": jnp.zeros((hidden_dim,), jnp.float32)})

    # DECModule cluster centers (not touched by weights_init -> keeps xavier_uniform)
    params["centers"] = _xavier_uniform(keys[views + 2], num_cluster, hidden_dim)
    return params


def prepare_params(params, *, hidden_dim, num_cluster, views, matmul_dtype=jnp.bfloat16):
    """Pad to lane-dense (128-multiple) widths, split W_f0 per view, cast matmul operands."""
    H = hidden_dim
    Hp = _round_up(H, 128)
    Kp = _round_up(num_cluster, 128)
    prep = {"views": views, "H": H, "Hp": Hp, "K": num_cluster, "Kp": Kp,
            "mm_dtype": matmul_dtype, "w_enc": [], "b_enc": [], "w_f0": []}

    for v in range(views):
        w = params["encoders"][v]["w"]                       # (IN_v, H)
        b = params["encoders"][v]["b"]                       # (H,)
        prep["w_enc"].append(jnp.pad(w, ((0, 0), (0, Hp - H))).astype(matmul_dtype))
        prep["b_enc"].append(jnp.pad(b, (0, Hp - H)).reshape(1, Hp).astype(jnp.float32))

    w0 = params["fusion"][0]["w"]                            # (H*views, H)
    b0 = params["fusion"][0]["b"]
    for v in range(views):
        blk = w0[v * H:(v + 1) * H, :]
        prep["w_f0"].append(jnp.pad(blk, ((0, Hp - H), (0, Hp - H))).astype(matmul_dtype))
    prep["b_f0"] = jnp.pad(b0, (0, Hp - H)).reshape(1, Hp).astype(jnp.float32)

    w1 = params["fusion"][1]["w"]
    b1 = params["fusion"][1]["b"]
    prep["w_f1"] = jnp.pad(w1, ((0, Hp - H), (0, Hp - H))).astype(matmul_dtype)
    prep["b_f1"] = jnp.pad(b1, (0, Hp - H)).reshape(1, Hp).astype(jnp.float32)

    c = params["centers"]                                    # (K, H)
    cp = jnp.pad(c, ((0, Kp - num_cluster), (0, Hp - H))).astype(jnp.float32)
    prep["centers"] = cp
    prep["csq"] = jnp.sum(cp * cp, axis=1).reshape(1, Kp)
    return prep


# ----------------------------------------------------------------------------
# CONAN forward (single fused pallas_call, gridded over batch)
# ----------------------------------------------------------------------------

def conan_forward(Xs, prep, *, alpha=1.0, block_batch=512):
    views = prep["views"]
    Hp, Kp, K = prep["Hp"], prep["Kp"], prep["K"]
    mm_dtype = prep["mm_dtype"]

    B = Xs[0].shape[0]
    bm = min(block_batch, _round_up(B, 8))   # batch tile (sublane-aligned)
    B_pad = _round_up(B, bm)
    Xs = [x.astype(jnp.float32) for x in Xs]
    if B_pad != B:
        Xs = [jnp.pad(x, ((0, B_pad - B), (0, 0))) for x in Xs]

    grid = (B_pad // bm,)
    resident = lambda shape: pl.BlockSpec(shape, lambda i: (0, 0))

    in_specs, args = [], []
    for v in range(views):                                   # streamed per-batch-tile inputs
        in_specs.append(pl.BlockSpec((bm, Xs[v].shape[1]), lambda i: (i, 0)))
        args.append(Xs[v])
    for v in range(views):
        in_specs.append(resident(prep["w_enc"][v].shape)); args.append(prep["w_enc"][v])
    for v in range(views):
        in_specs.append(resident((1, Hp))); args.append(prep["b_enc"][v])
    for v in range(views):
        in_specs.append(resident((Hp, Hp))); args.append(prep["w_f0"][v])
    for name in ("b_f0", "w_f1", "b_f1", "centers", "csq"):
        in_specs.append(resident(prep[name].shape)); args.append(prep[name])

    out_spec = pl.BlockSpec((bm, Kp), lambda i: (i, 0))

    # advisory cost hint for the XLA scheduler
    flops = 0
    for v in range(views):
        flops += 2 * B_pad * Xs[v].shape[1] * Hp             # encoder matmuls
        flops += 2 * B_pad * Hp * Hp                         # per-view fusion-0 accumulation
    flops += 2 * B_pad * Hp * Hp                             # fusion-1
    flops += 2 * B_pad * Hp * Kp                             # DEC cross term
    bytes_accessed = sum(int(a.size) * a.dtype.itemsize for a in args) + B_pad * Kp * 4
    cost = pl.CostEstimate(flops=flops, transcendentals=B_pad * Kp,
                           bytes_accessed=bytes_accessed)

    kernel = functools.partial(_conan_fused_kernel, n_views=views, alpha=float(alpha),
                               k_valid=K, mm_dtype=mm_dtype)

    y_pad = pl.pallas_call(
        kernel,
        out_shape=jax.ShapeDtypeStruct((B_pad, Kp), jnp.float32),
        grid=grid,
        in_specs=in_specs,
        out_specs=out_spec,
        compiler_params=pltpu.CompilerParams(dimension_semantics=("parallel",)),
        cost_estimate=cost,
    )(*args)
    return y_pad[:B, :K]


# ----------------------------------------------------------------------------
# Pure-JAX reference (same prepared/padded params) for validation
# ----------------------------------------------------------------------------

def conan_reference(Xs, prep, *, alpha=1.0):
    views, mm = prep["views"], prep["mm_dtype"]
    acc = None
    for v in range(views):
        xv = Xs[v].astype(jnp.float32).astype(mm)
        hv = jnp.dot(xv, prep["w_enc"][v], preferred_element_type=jnp.float32)
        hv = jnp.maximum(hv + prep["b_enc"][v], 0.0)
        part = jnp.dot(hv.astype(mm), prep["w_f0"][v], preferred_element_type=jnp.float32)
        acc = part if acc is None else acc + part
    z0 = jnp.maximum(acc + prep["b_f0"], 0.0)
    z = jnp.dot(z0.astype(mm), prep["w_f1"], preferred_element_type=jnp.float32) + prep["b_f1"]
    c = prep["centers"][:prep["K"], :]
    diff = z[:, None, :] - c[None, :, :]
    norm_sq = jnp.sum(diff * diff, axis=2)
    num = 1.0 / (1.0 + norm_sq / alpha)
    power = (alpha + 1.0) / 2.0
    if power != 1.0:
        num = num ** power
    return num / jnp.sum(num, axis=1, keepdims=True)


# ----------------------------------------------------------------------------
# main
# ----------------------------------------------------------------------------

if __name__ == "__main__":
    batch = 8
    views = 2
    input_channels = [16, 20]
    hidden_dim = 32
    num_cluster = 4

    key = jax.random.PRNGKey(0)
    k_params, k_x0, k_x1 = jax.random.split(key, 3)

    params = init_params(k_params,
                         input_channels=input_channels,
                         hidden_dim=hidden_dim,
                         num_cluster=num_cluster,
                         views=views)
    prep = prepare_params(params,
                          hidden_dim=hidden_dim,
                          num_cluster=num_cluster,
                          views=views,
                          matmul_dtype=jnp.bfloat16)

    Xs = [jax.random.normal(k_x0, (batch, input_channels[0]), jnp.float32),
          jax.random.normal(k_x1, (batch, input_channels[1]), jnp.float32)]

    y = conan_forward(Xs, prep, alpha=1.0)
    y = jax.block_until_ready(y)

    assert y.shape == (batch, num_cluster)
    # rows of the DEC soft-assignment must sum to 1 (exact final normalization)
    assert jnp.allclose(jnp.sum(y, axis=1), 1.0, atol=1e-5)
    # matches the straightforward (broadcast-subtract) reference up to approx-recip noise
    y_ref = conan_reference(Xs, prep, alpha=1.0)
    assert jnp.allclose(y, y_ref, atol=2e-2), float(jnp.max(jnp.abs(y - y_ref)))

    print("KERNEL_OK")
</pallas_src>

<mosaic_0001>
module attributes {stable_mosaic.version = 11 : i64} {
  func.func @_conan_fused_kernel(%arg0: i32, %arg1: memref<8x16xf32, #tpu.memory_space<vmem>>, %arg2: memref<8x20xf32, #tpu.memory_space<vmem>>, %arg3: memref<16x128xbf16, #tpu.memory_space<vmem>>, %arg4: memref<20x128xbf16, #tpu.memory_space<vmem>>, %arg5: memref<1x128xf32, #tpu.memory_space<vmem>>, %arg6: memref<1x128xf32, #tpu.memory_space<vmem>>, %arg7: memref<128x128xbf16, #tpu.memory_space<vmem>>, %arg8: memref<128x128xbf16, #tpu.memory_space<vmem>>, %arg9: memref<1x128xf32, #tpu.memory_space<vmem>>, %arg10: memref<128x128xbf16, #tpu.memory_space<vmem>>, %arg11: memref<1x128xf32, #tpu.memory_space<vmem>>, %arg12: memref<128x128xf32, #tpu.memory_space<vmem>>, %arg13: memref<1x128xf32, #tpu.memory_space<vmem>>, %arg14: memref<8x128xf32, #tpu.memory_space<vmem>>) attributes {dimension_semantics = [#tpu.dimension_semantics<parallel>], iteration_bounds = array<i64: 1>, scalar_prefetch = 0 : i64, scratch_operands = 0 : i64, tpu.core_type = #tpu.core_type<tc>, window_params = [{transform_indices = @transform_0, window_bounds = array<i64: 8, 16>}, {transform_indices = @transform_1, window_bounds = array<i64: 8, 20>}, {pipeline_mode = #tpu.pipeline_mode<synchronous>, transform_indices = @transform_2, window_bounds = array<i64: 16, 128>}, {pipeline_mode = #tpu.pipeline_mode<synchronous>, transform_indices = @transform_3, window_bounds = array<i64: 20, 128>}, {pipeline_mode = #tpu.pipeline_mode<synchronous>, transform_indices = @transform_4, window_bounds = array<i64: 1, 128>}, {pipeline_mode = #tpu.pipeline_mode<synchronous>, transform_indices = @transform_5, window_bounds = array<i64: 1, 128>}, {pipeline_mode = #tpu.pipeline_mode<synchronous>, transform_indices = @transform_6, window_bounds = array<i64: 128, 128>}, {pipeline_mode = #tpu.pipeline_mode<synchronous>, transform_indices = @transform_7, window_bounds = array<i64: 128, 128>}, {pipeline_mode = #tpu.pipeline_mode<synchronous>, transform_indices = @transform_8, window_bounds = array<i64: 1, 128>}, {pipeline_mode = #tpu.pipeline_mode<synchronous>, transform_indices = @transform_9, window_bounds = array<i64: 128, 128>}, {pipeline_mode = #tpu.pipeline_mode<synchronous>, transform_indices = @transform_10, window_bounds = array<i64: 1, 128>}, {pipeline_mode = #tpu.pipeline_mode<synchronous>, transform_indices = @transform_11, window_bounds = array<i64: 128, 128>}, {pipeline_mode = #tpu.pipeline_mode<synchronous>, transform_indices = @transform_12, window_bounds = array<i64: 1, 128>}, {transform_indices = @transform_13, window_bounds = array<i64: 8, 128>}]} {
    %c0 = arith.constant 0 : index
    %c0_0 = arith.constant 0 : index
    %0 = vector.load %arg1[%c0, %c0_0] : memref<8x16xf32, #tpu.memory_space<vmem>>, vector<8x16xf32>
    %1 = arith.truncf %0 : vector<8x16xf32> to vector<8x16xbf16>
    %c0_1 = arith.constant 0 : index
    %c0_2 = arith.constant 0 : index
    %2 = vector.load %arg3[%c0_1, %c0_2] : memref<16x128xbf16, #tpu.memory_space<vmem>>, vector<16x128xbf16>
    %cst = arith.constant dense<0.000000e+00> : vector<8x128xf32>
    %3 = tpu.matmul %1, %2, %cst {dimension_numbers = #tpu.dot_dimension_numbers<[1], [0], [0], [1], [0, 0, 1, 1], [], []>} : vector<8x16xbf16>, vector<16x128xbf16>, vector<8x128xf32> -> vector<8x128xf32>
    %c0_3 = arith.constant 0 : index
    %c0_4 = arith.constant 0 : index
    %4 = vector.load %arg5[%c0_3, %c0_4] : memref<1x128xf32, #tpu.memory_space<vmem>>, vector<1x128xf32>
    %5 = vector.broadcast %4 : vector<1x128xf32> to vector<8x128xf32>
    %6 = arith.addf %3, %5 : vector<8x128xf32>
    %cst_5 = arith.constant 0.000000e+00 : f32
    %7 = vector.broadcast %cst_5 : f32 to vector<8x128xf32>
    %8 = arith.maximumf %6, %7 : vector<8x128xf32>
    %9 = arith.truncf %8 : vector<8x128xf32> to vector<8x128xbf16>
    %c0_6 = arith.constant 0 : index
    %c0_7 = arith.constant 0 : index
    %10 = vector.load %arg7[%c0_6, %c0_7] : memref<128x128xbf16, #tpu.memory_space<vmem>>, vector<128x128xbf16>
    %cst_8 = arith.constant dense<0.000000e+00> : vector<8x128xf32>
    %11 = tpu.matmul %9, %10, %cst_8 {dimension_numbers = #tpu.dot_dimension_numbers<[1], [0], [0], [1], [0, 0, 1, 1], [], []>} : vector<8x128xbf16>, vector<128x128xbf16>, vector<8x128xf32> -> vector<8x128xf32>
    %c0_9 = arith.constant 0 : index
    %c0_10 = arith.constant 0 : index
    %12 = vector.load %arg2[%c0_9, %c0_10] : memref<8x20xf32, #tpu.memory_space<vmem>>, vector<8x20xf32>
    %13 = arith.truncf %12 : vector<8x20xf32> to vector<8x20xbf16>
    %c0_11 = arith.constant 0 : index
    %c0_12 = arith.constant 0 : index
    %14 = vector.load %arg4[%c0_11, %c0_12] : memref<20x128xbf16, #tpu.memory_space<vmem>>, vector<20x128xbf16>
    %cst_13 = arith.constant dense<0.000000e+00> : vector<8x128xf32>
    %15 = tpu.matmul %13, %14, %cst_13 {dimension_numbers = #tpu.dot_dimension_numbers<[1], [0], [0], [1], [0, 0, 1, 1], [], []>} : vector<8x20xbf16>, vector<20x128xbf16>, vector<8x128xf32> -> vector<8x128xf32>
    %c0_14 = arith.constant 0 : index
    %c0_15 = arith.constant 0 : index
    %16 = vector.load %arg6[%c0_14, %c0_15] : memref<1x128xf32, #tpu.memory_space<vmem>>, vector<1x128xf32>
    %17 = vector.broadcast %16 : vector<1x128xf32> to vector<8x128xf32>
    %18 = arith.addf %15, %17 : vector<8x128xf32>
    %cst_16 = arith.constant 0.000000e+00 : f32
    %19 = vector.broadcast %cst_16 : f32 to vector<8x128xf32>
    %20 = arith.maximumf %18, %19 : vector<8x128xf32>
    %21 = arith.truncf %20 : vector<8x128xf32> to vector<8x128xbf16>
    %c0_17 = arith.constant 0 : index
    %c0_18 = arith.constant 0 : index
    %22 = vector.load %arg8[%c0_17, %c0_18] : memref<128x128xbf16, #tpu.memory_space<vmem>>, vector<128x128xbf16>
    %cst_19 = arith.constant dense<0.000000e+00> : vector<8x128xf32>
    %23 = tpu.matmul %21, %22, %cst_19 {dimension_numbers = #tpu.dot_dimension_numbers<[1], [0], [0], [1], [0, 0, 1, 1], [], []>} : vector<8x128xbf16>, vector<128x128xbf16>, vector<8x128xf32> -> vector<8x128xf32>
    %24 = arith.addf %11, %23 : vector<8x128xf32>
    %c0_20 = arith.constant 0 : index
    %c0_21 = arith.constant 0 : index
    %25 = vector.load %arg9[%c0_20, %c0_21] : memref<1x128xf32, #tpu.memory_space<vmem>>, vector<1x128xf32>
    %26 = vector.broadcast %25 : vector<1x128xf32> to vector<8x128xf32>
    %27 = arith.addf %24, %26 : vector<8x128xf32>
    %cst_22 = arith.constant 0.000000e+00 : f32
    %28 = vector.broadcast %cst_22 : f32 to vector<8x128xf32>
    %29 = arith.maximumf %27, %28 : vector<8x128xf32>
    %30 = arith.truncf %29 : vector<8x128xf32> to vector<8x128xbf16>
    %c0_23 = arith.constant 0 : index
    %c0_24 = arith.constant 0 : index
    %31 = vector.load %arg10[%c0_23, %c0_24] : memref<128x128xbf16, #tpu.memory_space<vmem>>, vector<128x128xbf16>
    %cst_25 = arith.constant dense<0.000000e+00> : vector<8x128xf32>
    %32 = tpu.matmul %30, %31, %cst_25 {dimension_numbers = #tpu.dot_dimension_numbers<[1], [0], [0], [1], [0, 0, 1, 1], [], []>} : vector<8x128xbf16>, vector<128x128xbf16>, vector<8x128xf32> -> vector<8x128xf32>
    %c0_26 = arith.constant 0 : index
    %c0_27 = arith.constant 0 : index
    %33 = vector.load %arg11[%c0_26, %c0_27] : memref<1x128xf32, #tpu.memory_space<vmem>>, vector<1x128xf32>
    %34 = vector.broadcast %33 : vector<1x128xf32> to vector<8x128xf32>
    %35 = arith.addf %32, %34 : vector<8x128xf32>
    %c0_28 = arith.constant 0 : index
    %c0_29 = arith.constant 0 : index
    %36 = vector.load %arg12[%c0_28, %c0_29] : memref<128x128xf32, #tpu.memory_space<vmem>>, vector<128x128xf32>
    %37 = arith.mulf %35, %35 : vector<8x128xf32>
    %cst_30 = arith.constant dense<0.000000e+00> : vector<8xf32>
    %38 = vector.multi_reduction <add>, %37, %cst_30 [1] : vector<8x128xf32> to vector<8xf32>
    %39 = vector.shape_cast %38 : vector<8xf32> to vector<8x1xf32>
    %cst_31 = arith.constant dense<0.000000e+00> : vector<8x128xf32>
    %40 = tpu.matmul %35, %36, %cst_31 {dimension_numbers = #tpu.dot_dimension_numbers<[1], [1], [0], [0], [0, 0, 1, 0], [], []>} : vector<8x128xf32>, vector<128x128xf32>, vector<8x128xf32> -> vector<8x128xf32>
    %c0_32 = arith.constant 0 : index
    %c0_33 = arith.constant 0 : index
    %41 = vector.load %arg13[%c0_32, %c0_33] : memref<1x128xf32, #tpu.memory_space<vmem>>, vector<1x128xf32>
    %42 = vector.broadcast %39 : vector<8x1xf32> to vector<8x128xf32>
    %43 = vector.broadcast %41 : vector<1x128xf32> to vector<8x128xf32>
    %44 = arith.addf %42, %43 : vector<8x128xf32>
    %cst_34 = arith.constant 2.000000e+00 : f32
    %45 = vector.broadcast %cst_34 : f32 to vector<8x128xf32>
    %46 = arith.mulf %45, %40 : vector<8x128xf32>
    %47 = arith.subf %44, %46 : vector<8x128xf32>
    %cst_35 = arith.constant 0.000000e+00 : f32
    %48 = vector.broadcast %cst_35 : f32 to vector<8x128xf32>
    %49 = arith.maximumf %47, %48 : vector<8x128xf32>
    %cst_36 = arith.constant 1.000000e+00 : f32
    %50 = vector.broadcast %cst_36 : f32 to vector<8x128xf32>
    %51 = arith.mulf %49, %50 : vector<8x128xf32>
    %cst_37 = arith.constant 1.000000e+00 : f32
    %52 = vector.broadcast %cst_37 : f32 to vector<8x128xf32>
    %53 = arith.addf %52, %51 : vector<8x128xf32>
    %54 = tpu.reciprocal %53 {approx = true} : vector<8x128xf32> -> vector<8x128xf32>
    %55 = tpu.iota {dimensions = array<i32: 1>} : vector<8x128xi32>
    %c4_i32 = arith.constant 4 : i32
    %56 = vector.broadcast %c4_i32 : i32 to vector<8x128xi32>
    %57 = arith.cmpi slt, %55, %56 : vector<8x128xi32>
    %cst_38 = arith.constant 0.000000e+00 : f32
    %58 = vector.broadcast %cst_38 : f32 to vector<8x128xf32>
    %59 = arith.select %57, %54, %58 : vector<8x128xi1>, vector<8x128xf32>
    %cst_39 = arith.constant dense<0.000000e+00> : vector<8xf32>
    %60 = vector.multi_reduction <add>, %59, %cst_39 [1] : vector<8x128xf32> to vector<8xf32>
    %61 = vector.shape_cast %60 : vector<8xf32> to vector<8x1xf32>
    %62 = vector.broadcast %61 : vector<8x1xf32> to vector<8x128xf32>
    %63 = arith.divf %59, %62 : vector<8x128xf32>
    %c0_40 = arith.constant 0 : index
    %c0_41 = arith.constant 0 : index
    %64 = vector.load %arg14[%c0_40, %c0_41] : memref<8x128xf32, #tpu.memory_space<vmem>>, vector<8x128xf32>
    tpu.vector_store %arg14[%c0_40, %c0_41], %63 {strides = array<i32>} : memref<8x128xf32, #tpu.memory_space<vmem>>, vector<8x128xf32>,
    return
  }
  func.func @transform_0(%arg0: i32) -> (i32, i32) {
    %c0_i32 = arith.constant 0 : i32
    %c0_i32_0 = arith.constant 0 : i32
    return %arg0, %c0_i32 : i32, i32
  }
  func.func @transform_1(%arg0: i32) -> (i32, i32) {
    %c0_i32 = arith.constant 0 : i32
    %c0_i32_0 = arith.constant 0 : i32
    return %arg0, %c0_i32 : i32, i32
  }
  func.func @transform_2(%arg0: i32) -> (i32, i32) {
    %c0_i32 = arith.constant 0 : i32
    %c0_i32_0 = arith.constant 0 : i32
    %c0_i32_1 = arith.constant 0 : i32
    return %c0_i32, %c0_i32_0 : i32, i32
  }
  func.func @transform_3(%arg0: i32) -> (i32, i32) {
    %c0_i32 = arith.constant 0 : i32
    %c0_i32_0 = arith.constant 0 : i32
    %c0_i32_1 = arith.constant 0 : i32
    return %c0_i32, %c0_i32_0 : i32, i32
  }
  func.func @transform_4(%arg0: i32) -> (i32, i32) {
    %c0_i32 = arith.constant 0 : i32
    %c0_i32_0 = arith.constant 0 : i32
    %c0_i32_1 = arith.constant 0 : i32
    return %c0_i32, %c0_i32_0 : i32, i32
  }
  func.func @transform_5(%arg0: i32) -> (i32, i32) {
    %c0_i32 = arith.constant 0 : i32
    %c0_i32_0 = arith.constant 0 : i32
    %c0_i32_1 = arith.constant 0 : i32
    return %c0_i32, %c0_i32_0 : i32, i32
  }
  func.func @transform_6(%arg0: i32) -> (i32, i32) {
    %c0_i32 = arith.constant 0 : i32
    %c0_i32_0 = arith.constant 0 : i32
    %c0_i32_1 = arith.constant 0 : i32
    return %c0_i32, %c0_i32_0 : i32, i32
  }
  func.func @transform_7(%arg0: i32) -> (i32, i32) {
    %c0_i32 = arith.constant 0 : i32
    %c0_i32_0 = arith.constant 0 : i32
    %c0_i32_1 = arith.constant 0 : i32
    return %c0_i32, %c0_i32_0 : i32, i32
  }
  func.func @transform_8(%arg0: i32) -> (i32, i32) {
    %c0_i32 = arith.constant 0 : i32
    %c0_i32_0 = arith.constant 0 : i32
    %c0_i32_1 = arith.constant 0 : i32
    return %c0_i32, %c0_i32_0 : i32, i32
  }
  func.func @transform_9(%arg0: i32) -> (i32, i32) {
    %c0_i32 = arith.constant 0 : i32
    %c0_i32_0 = arith.constant 0 : i32
    %c0_i32_1 = arith.constant 0 : i32
    return %c0_i32, %c0_i32_0 : i32, i32
  }
  func.func @transform_10(%arg0: i32) -> (i32, i32) {
    %c0_i32 = arith.constant 0 : i32
    %c0_i32_0 = arith.constant 0 : i32
    %c0_i32_1 = arith.constant 0 : i32
    return %c0_i32, %c0_i32_0 : i32, i32
  }
  func.func @transform_11(%arg0: i32) -> (i32, i32) {
    %c0_i32 = arith.constant 0 : i32
    %c0_i32_0 = arith.constant 0 : i32
    %c0_i32_1 = arith.constant 0 : i32
    return %c0_i32, %c0_i32_0 : i32, i32
  }
  func.func @transform_12(%arg0: i32) -> (i32, i32) {
    %c0_i32 = arith.constant 0 : i32
    %c0_i32_0 = arith.constant 0 : i32
    %c0_i32_1 = arith.constant 0 : i32
    return %c0_i32, %c0_i32_0 : i32, i32
  }
  func.func @transform_13(%arg0: i32) -> (i32, i32) {
    %c0_i32 = arith.constant 0 : i32
    %c0_i32_0 = arith.constant 0 : i32
    return %arg0, %c0_i32 : i32, i32
  }
}

</mosaic_0001>

<llo_original>
// kernel: tpu_custom_call.1
$region0: #{tpu_custom_call.1}
  #allocation0 [shape = 'u32[]', space=smem, size = 0x4, offset = 0x4, fixed_abs, tag = 'smem constant byte address 0x4 - core index']
  #allocation1 [shape = 'u32[144,128]{1,0:T(1,128)}', space=vmem, size = 0x12000, scoped, tag = 'internal scratch']
  %s0 = inlined_call_operand.hbm [shape: f32[8,16], index: 0, kind: input, shape index: {}]
  %s1 = inlined_call_operand.hbm [shape: f32[8,20], index: 1, kind: input, shape index: {}]
  %s2 = inlined_call_operand.hbm [shape: bf16[16,128], index: 2, kind: input, shape index: {}]
  %s3 = inlined_call_operand.hbm [shape: bf16[20,128], index: 3, kind: input, shape index: {}]
  %s4 = inlined_call_operand.vmem [shape: f32[1,128], index: 4, kind: input, shape index: {}]
  %s5 = inlined_call_operand.vmem [shape: f32[1,128], index: 5, kind: input, shape index: {}]
  %s6 = inlined_call_operand.hbm [shape: bf16[128,128], index: 6, kind: input, shape index: {}]
  %s7 = inlined_call_operand.hbm [shape: bf16[128,128], index: 7, kind: input, shape index: {}]
  %s8 = inlined_call_operand.vmem [shape: f32[1,128], index: 8, kind: input, shape index: {}]
  %s9 = inlined_call_operand.hbm [shape: bf16[128,128], index: 9, kind: input, shape index: {}]
  %s10 = inlined_call_operand.vmem [shape: f32[1,128], index: 10, kind: input, shape index: {}]
  %s11 = inlined_call_operand.hbm [shape: f32[128,128], index: 11, kind: input, shape index: {}]
  %s12 = inlined_call_operand.vmem [shape: f32[1,128], index: 12, kind: input, shape index: {}]
  %s13 = inlined_call_operand.hbm [shape: f32[8,128], index: 13, kind: output, shape index: {}]
  %s14 = sld [smem:[#allocation0]]
  $region94: #{tpu_custom_call.1} parent=0
    _
  %s16 = ssub.s32 1, %s14
  %s17 = scalar_select 0, %s16, %s14
  $region1: #{tpu_custom_call.1} parent=0
    #allocation2 [shape = 'u8[4096]{0}', space=vmem, size = 0x1000, scoped, tag = 'input window, operand 0, single buffered']
    #allocation3 [shape = 's32[1]{0}', space=sflag, size = 0x4, scoped, tag = 'scoped memory for tpu_custom_call.1']
    #allocation4 [shape = 's32[1]{0}', space=sflag, size = 0x4, scoped, tag = 'scoped memory for tpu_custom_call.1']
    #allocation5 [shape = 'u8[4096]{0}', space=vmem, size = 0x1000, scoped, tag = 'input window, operand 1, single buffered']
    #allocation6 [shape = 's32[1]{0}', space=sflag, size = 0x4, scoped, tag = 'scoped memory for tpu_custom_call.1']
    #allocation7 [shape = 'u8[4096]{0}', space=vmem, size = 0x1000, scoped, tag = 'input window, operand 2, single buffered']
    #allocation8 [shape = 'u8[6144]{0}', space=vmem, size = 0x1800, scoped, tag = 'input window, operand 3, single buffered']
    #allocation9 [shape = 's32[1]{0}', space=sflag, size = 0x4, scoped, tag = 'scoped memory for tpu_custom_call.1']
    #allocation10 [shape = 'u8[32768]{0}', space=vmem, size = 0x8000, scoped, tag = 'input window, operand 6, single buffered']
    #allocation11 [shape = 'u8[32768]{0}', space=vmem, size = 0x8000, scoped, tag = 'input window, operand 7, single buffered']
    #allocation12 [shape = 's32[1]{0}', space=sflag, size = 0x4, scoped, tag = 'scoped memory for tpu_custom_call.1']
    #allocation13 [shape = 'u8[32768]{0}', space=vmem, size = 0x8000, scoped, tag = 'input window, operand 9, single buffered']
    #allocation14 [shape = 'u8[65536]{0}', space=vmem, size = 0x10000, scoped, tag = 'input window, operand 11, single buffered']
    #allocation15 [shape = 's32[1]{0}', space=sflag, size = 0x4, scoped, tag = 'scoped memory for tpu_custom_call.1']
    #allocation16 [shape = 'u8[4096]{0}', space=vmem, size = 0x1000, scoped, tag = 'output window, operand 0, single buffered']
    %18 = vsyncpa [#allocation3], 0
    %19 = vsyncpa [#allocation6], 0
    %20 = vsyncpa [#allocation9], 0
    %21 = vsyncpa [#allocation12], 0
    %22 = vsyncpa [#allocation15], 0
    %23 = vsyncpa [#allocation4], 0
    // Predicated region
    $region2: #{tpu_custom_call.1} parent=1 // pred_check
      _
    $region3: #{tpu_custom_call.1} parent=1 // pred_check_branch
      %25 = sbr.rel (0) target = $region5
    $region4: #{tpu_custom_call.1} parent=1 // pred_region
      %s27 = ssub.s32 128, 128
      %28 = vsyncadd [#allocation3], %s27
      %s30 = sshll.u32 [#allocation2], 4
      %s31 = int_to_ptr.vmem [resolvable:$true] %s30
      %33 = dma.hbm_to_vmem [thread:$0]  %s0, 128, %s31, [#allocation3]
    $region5: #{tpu_custom_call.1} parent=1 // pred_fallthru
      _
    // Predicated region
    $region6: #{tpu_custom_call.1} parent=1 // pred_check
      _
    $region7: #{tpu_custom_call.1} parent=1 // pred_check_branch
      %35 = sbr.rel (0) target = $region9
    $region8: #{tpu_custom_call.1} parent=1 // pred_region
      %s37 = ssub.s32 128, 128
      %38 = vsyncadd [#allocation6], %s37
      %s40 = sshll.u32 [#allocation5], 4
      %s41 = int_to_ptr.vmem [resolvable:$true] %s40
      %43 = dma.hbm_to_vmem [thread:$0]  %s1, 128, %s41, [#allocation6]
    $region9: #{tpu_custom_call.1} parent=1 // pred_fallthru
      _
    // Predicated region
    $region10: #{tpu_custom_call.1} parent=1 // pred_check
      _
    $region11: #{tpu_custom_call.1} parent=1 // pred_check_branch
      %45 = sbr.rel (0) target = $region13
    $region12: #{tpu_custom_call.1} parent=1 // pred_region
      %s47 = ssub.s32 128, 128
      %48 = vsyncadd [#allocation6], %s47
      %s49 = sshll.u32 [#allocation7], 4
      %s50 = int_to_ptr.vmem [resolvable:$true] %s49
      %55 = dma.hbm_to_vmem [thread:$0]  %s2, 128, %s50, [#allocation6], 64, 64, 4
    $region13: #{tpu_custom_call.1} parent=1 // pred_fallthru
      _
    // Predicated region
    $region14: #{tpu_custom_call.1} parent=1 // pred_check
      _
    $region15: #{tpu_custom_call.1} parent=1 // pred_check_branch
      %57 = sbr.rel (0) target = $region17
    $region16: #{tpu_custom_call.1} parent=1 // pred_region
      %s59 = ssub.s32 192, 192
      %60 = vsyncadd [#allocation9], %s59
      %s61 = sshll.u32 [#allocation8], 4
      %s62 = int_to_ptr.vmem [resolvable:$true] %s61
      %67 = dma.hbm_to_vmem [thread:$0]  %s3, 192, %s62, [#allocation9], 64, 64, 4
    $region17: #{tpu_custom_call.1} parent=1 // pred_fallthru
      _
    // Predicated region
    $region18: #{tpu_custom_call.1} parent=1 // pred_check
      _
    $region19: #{tpu_custom_call.1} parent=1 // pred_check_branch
      %69 = sbr.rel (0) target = $region21
    $region20: #{tpu_custom_call.1} parent=1 // pred_region
      _
    $region21: #{tpu_custom_call.1} parent=1 // pred_fallthru
      _
    // Predicated region
    $region22: #{tpu_custom_call.1} parent=1 // pred_check
      _
    $region23: #{tpu_custom_call.1} parent=1 // pred_check_branch
      %71 = sbr.rel (0) target = $region25
    $region24: #{tpu_custom_call.1} parent=1 // pred_region
      _
    $region25: #{tpu_custom_call.1} parent=1 // pred_fallthru
      _
    // Predicated region
    $region26: #{tpu_custom_call.1} parent=1 // pred_check
      _
    $region27: #{tpu_custom_call.1} parent=1 // pred_check_branch
      %73 = sbr.rel (0) target = $region29
    $region28: #{tpu_custom_call.1} parent=1 // pred_region
      %s75 = ssub.s32 1024, 1024
      %76 = vsyncadd [#allocation9], %s75
      %s77 = sshll.u32 [#allocation10], 4
      %s78 = int_to_ptr.vmem [resolvable:$true] %s77
      %83 = dma.hbm_to_vmem [thread:$0]  %s6, 1024, %s78, [#allocation9], 64, 64, 4
    $region29: #{tpu_custom_call.1} parent=1 // pred_fallthru
      _
    // Predicated region
    $region30: #{tpu_custom_call.1} parent=1 // pred_check
      _
    $region31: #{tpu_custom_call.1} parent=1 // pred_check_branch
      %85 = sbr.rel (0) target = $region33
    $region32: #{tpu_custom_call.1} parent=1 // pred_region
      %s87 = ssub.s32 1024, 1024
      %88 = vsyncadd [#allocation12], %s87
      %s89 = sshll.u32 [#allocation11], 4
      %s90 = int_to_ptr.vmem [resolvable:$true] %s89
      %95 = dma.hbm_to_vmem [thread:$0]  %s7, 1024, %s90, [#allocation12], 64, 64, 4
    $region33: #{tpu_custom_call.1} parent=1 // pred_fallthru
      _
    // Predicated region
    $region34: #{tpu_custom_call.1} parent=1 // pred_check
      _
    $region35: #{tpu_custom_call.1} parent=1 // pred_check_branch
      %97 = sbr.rel (0) target = $region37
    $region36: #{tpu_custom_call.1} parent=1 // pred_region
      _
    $region37: #{tpu_custom_call.1} parent=1 // pred_fallthru
      _
    // Predicated region
    $region38: #{tpu_custom_call.1} parent=1 // pred_check
      _
    $region39: #{tpu_custom_call.1} parent=1 // pred_check_branch
      %99 = sbr.rel (0) target = $region41
    $region40: #{tpu_custom_call.1} parent=1 // pred_region
      %s101 = ssub.s32 1024, 1024
      %102 = vsyncadd [#allocation12], %s101
      %s103 = sshll.u32 [#allocation13], 4
      %s104 = int_to_ptr.vmem [resolvable:$true] %s103
      %109 = dma.hbm_to_vmem [thread:$0]  %s9, 1024, %s104, [#allocation12], 64, 64, 4
    $region41: #{tpu_custom_call.1} parent=1 // pred_fallthru
      _
    // Predicated region
    $region42: #{tpu_custom_call.1} parent=1 // pred_check
      _
    $region43: #{tpu_custom_call.1} parent=1 // pred_check_branch
      %111 = sbr.rel (0) target = $region45
    $region44: #{tpu_custom_call.1} parent=1 // pred_region
      _
    $region45: #{tpu_custom_call.1} parent=1 // pred_fallthru
      _
    // Predicated region
    $region46: #{tpu_custom_call.1} parent=1 // pred_check
      _
    $region47: #{tpu_custom_call.1} parent=1 // pred_check_branch
      %113 = sbr.rel (0) target = $region49
    $region48: #{tpu_custom_call.1} parent=1 // pred_region
      %s115 = ssub.s32 2048, 2048
      %116 = vsyncadd [#allocation15], %s115
      %s117 = sshll.u32 [#allocation14], 4
      %s118 = int_to_ptr.vmem [resolvable:$true] %s117
      %123 = dma.hbm_to_vmem [thread:$0]  %s11, 2048, %s118, [#allocation15], 128, 128, 8
    $region49: #{tpu_custom_call.1} parent=1 // pred_fallthru
      _
    // Predicated region
    $region50: #{tpu_custom_call.1} parent=1 // pred_check
      _
    $region51: #{tpu_custom_call.1} parent=1 // pred_check_branch
      %125 = sbr.rel (0) target = $region53
    $region52: #{tpu_custom_call.1} parent=1 // pred_region
      _
    $region53: #{tpu_custom_call.1} parent=1 // pred_fallthru
      _
    // Predicated region
    $region54: #{tpu_custom_call.1} parent=1 // pred_check
      _
    $region55: #{tpu_custom_call.1} parent=1 // pred_check_branch
      %127 = sbr.rel (0) target = $region57
    $region56: #{tpu_custom_call.1} parent=1 // pred_region
      %128 = dma.done [#allocation3], 128
    $region57: #{tpu_custom_call.1} parent=1 // pred_fallthru
      _
    // Predicated region
    $region58: #{tpu_custom_call.1} parent=1 // pred_check
      _
    $region59: #{tpu_custom_call.1} parent=1 // pred_check_branch
      %130 = sbr.rel (0) target = $region61
    $region60: #{tpu_custom_call.1} parent=1 // pred_region
      %131 = dma.done [#allocation6], 128
    $region61: #{tpu_custom_call.1} parent=1 // pred_fallthru
      _
    // Predicated region
    $region62: #{tpu_custom_call.1} parent=1 // pred_check
      _
    $region63: #{tpu_custom_call.1} parent=1 // pred_check_branch
      %133 = sbr.rel (0) target = $region65
    $region64: #{tpu_custom_call.1} parent=1 // pred_region
      %134 = dma.done [#allocation6], 128
    $region65: #{tpu_custom_call.1} parent=1 // pred_fallthru
      _
    // Predicated region
    $region66: #{tpu_custom_call.1} parent=1 // pred_check
      _
    $region67: #{tpu_custom_call.1} parent=1 // pred_check_branch
      %136 = sbr.rel (0) target = $region69
    $region68: #{tpu_custom_call.1} parent=1 // pred_region
      %137 = dma.done [#allocation9], 192
    $region69: #{tpu_custom_call.1} parent=1 // pred_fallthru
      _
    // Predicated region
    $region70: #{tpu_custom_call.1} parent=1 // pred_check
      _
    $region71: #{tpu_custom_call.1} parent=1 // pred_check_branch
      %139 = sbr.rel (0) target = $region73
    $region72: #{tpu_custom_call.1} parent=1 // pred_region
      %140 = dma.done [#allocation9], 1024
    $region73: #{tpu_custom_call.1} parent=1 // pred_fallthru
      _
    // Predicated region
    $region74: #{tpu_custom_call.1} parent=1 // pred_check
      _
    $region75: #{tpu_custom_call.1} parent=1 // pred_check_branch
      %142 = sbr.rel (0) target = $region77
    $region76: #{tpu_custom_call.1} parent=1 // pred_region
      %143 = dma.done [#allocation12], 1024
    $region77: #{tpu_custom_call.1} parent=1 // pred_fallthru
      _
    // Predicated region
    $region78: #{tpu_custom_call.1} parent=1 // pred_check
      _
    $region79: #{tpu_custom_call.1} parent=1 // pred_check_branch
      %145 = sbr.rel (0) target = $region81
    $region80: #{tpu_custom_call.1} parent=1 // pred_region
      %146 = dma.done [#allocation12], 1024
    $region81: #{tpu_custom_call.1} parent=1 // pred_fallthru
      _
    // Predicated region
    $region82: #{tpu_custom_call.1} parent=1 // pred_check
      _
    $region83: #{tpu_custom_call.1} parent=1 // pred_check_branch
      %148 = sbr.rel (0) target = $region85
    $region84: #{tpu_custom_call.1} parent=1 // pred_region
      %149 = dma.done [#allocation15], 2048
    $region85: #{tpu_custom_call.1} parent=1 // pred_fallthru
      _
    %v151 = vld [vmem:[#allocation2] sm:$0xff]
    %v152 = vpack.c.bf16 %v151, %v151
    %v153 = vld [vmem:[#allocation7] sm:$0xf]
    %v154 = vld [vmem:[#allocation7 + $0x4] sm:$0xf]
    %v155 = vld [vmem:[%s4] sm:$0x1]
    %v157 = vlaneseq
    %v158 = vshrl.u32 %v157, 7
    %v159 = vsub.s32 0, %v158
    %v160 = vrot.slane %v155, %v159
    %v164 = vunpack.c.l.b16 %v153
    %v165 = vunpack.c.l.b16 %v154
    %v166 = vpack.c.b16 %v165, %v164
    %vm168 = vcmask 130048
    %v170 = vsel %vm168, %v152, 0
    %172 = vmatprep.subr.bf16.mxu0 0
    %173 = vmatpush1.bf16.msra.mxu0 %v166
    %174 = vmatprep.subr.bf16.mxu0 0
    %175 = vmatpush1.bf16.msra.mxu0 0
    %176 = vmatprep.subr.bf16.mxu0 0
    %177 = vmatpush1.bf16.msra.mxu0 0
    %178 = vmatprep.subr.bf16.mxu0 0
    %179 = vmatpush1.bf16.msra.mxu0 0
    %180 = vmatprep.subr.bf16.mxu0 0
    %181 = vmatpush1.bf16.msra.mxu0 0
    %182 = vmatprep.subr.bf16.mxu0 0
    %183 = vmatpush1.bf16.msra.mxu0 0
    %184 = vmatprep.subr.bf16.mxu0 0
    %185 = vmatpush1.bf16.msra.mxu0 0
    %186 = vmatprep.subr.bf16.mxu0 0
    %187 = vmatpush1.bf16.msra.mxu0 0
    %188 = vmatprep.subr.bf16.mxu0 0
    %189 = vmatpush1.bf16.msra.mxu0 0
    %190 = vmatprep.subr.bf16.mxu0 0
    %191 = vmatpush1.bf16.msra.mxu0 0
    %192 = vmatprep.subr.bf16.mxu0 0
    %193 = vmatpush1.bf16.msra.mxu0 0
    %194 = vmatprep.subr.bf16.mxu0 0
    %195 = vmatpush1.bf16.msra.mxu0 0
    %196 = vmatprep.subr.bf16.mxu0 0
    %197 = vmatpush1.bf16.msra.mxu0 0
    %198 = vmatprep.subr.bf16.mxu0 0
    %199 = vmatpush1.bf16.msra.mxu0 0
    %200 = vmatprep.subr.bf16.mxu0 0
    %201 = vmatpush1.bf16.msra.mxu0 0
    %202 = vmatprep.subr.bf16.mxu0 0
    %203 = vmatpush1.bf16.msra.mxu0 0
    %204 = vmatprep.mubr.bf16.mxu0 0
    %205 = vmatmul.mubr.bf16.gmra.mrb[0].mxu0 %v170
    %v206 = vpop.f32.mrb[0].mxu0
    %v207 = vadd.f32 %v160, %v206
    %v208 = vpop.f32.mrb[0].mxu0
    %v209 = vpop.f32.mrb[0].mxu0
    %v210 = vpop.f32.mrb[0].mxu0
    %211 = vdwg.mxu0
    %v212 = vmax.f32 %v207, 0.0
    %v213 = vpack.c.bf16 %v212, %v212
    %v214 = vld [vmem:[#allocation10] sm:$0xf]
    %v215 = vld [vmem:[#allocation10 + $0x4] sm:$0xf]
    %v216 = vld [vmem:[#allocation10 + $0x8] sm:$0xf]
    %v217 = vld [vmem:[#allocation10 + $0xc] sm:$0xf]
    %v218 = vld [vmem:[#allocation10 + $0x10] sm:$0xf]
    %v219 = vld [vmem:[#allocation10 + $0x14] sm:$0xf]
    %v220 = vld [vmem:[#allocation10 + $0x18] sm:$0xf]
    %v221 = vld [vmem:[#allocation10 + $0x1c] sm:$0xf]
    %v222 = vld [vmem:[#allocation10 + $0x20] sm:$0xf]
    %v223 = vld [vmem:[#allocation10 + $0x24] sm:$0xf]
    %v224 = vld [vmem:[#allocation10 + $0x28] sm:$0xf]
    %v225 = vld [vmem:[#allocation10 + $0x2c] sm:$0xf]
    %v226 = vld [vmem:[#allocation10 + $0x30] sm:$0xf]
    %v227 = vld [vmem:[#allocation10 + $0x34] sm:$0xf]
    %v228 = vld [vmem:[#allocation10 + $0x38] sm:$0xf]
    %v229 = vld [vmem:[#allocation10 + $0x3c] sm:$0xf]
    %v230 = vld [vmem:[#allocation5] sm:$0xff]
    %v231 = vpack.c.bf16 %v230, %v230
    %v232 = vld [vmem:[#allocation8] sm:$0xf]
    %v233 = vld [vmem:[#allocation8 + $0x4] sm:$0xf]
    %v234 = vld [vmem:[#allocation8 + $0x8] sm:$0x3]
    %v235 = vld [vmem:[%s5] sm:$0x1]
    %v237 = vlaneseq
    %v238 = vshrl.u32 %v237, 7
    %v239 = vsub.s32 0, %v238
    %v240 = vrot.slane %v235, %v239
    %v245 = vunpack.c.l.b16 %v232
    %v246 = vunpack.c.l.b16 %v233
    %v247 = vunpack.c.l.b16 %v234
    %v248 = vpack.c.b16 %v246, %v245
    %v249 = vpack.c.b16 %v247, %v247
    %vm251 = vcmask 162816
    %v253 = vsel %vm251, %v231, 0
    %vm255 = vcmask 1041408
    %v257 = vsel %vm255, %v249, 0
    %259 = vmatprep.subr.bf16.mxu0 0
    %260 = vmatpush1.bf16.msra.mxu0 %v248
    %261 = vmatprep.subr.bf16.mxu0 0
    %262 = vmatpush1.bf16.msra.mxu0 %v257
    %263 = vmatprep.subr.bf16.mxu0 0
    %264 = vmatpush1.bf16.msra.mxu0 0
    %265 = vmatprep.subr.bf16.mxu0 0
    %266 = vmatpush1.bf16.msra.mxu0 0
    %267 = vmatprep.subr.bf16.mxu0 0
    %268 = vmatpush1.bf16.msra.mxu0 0
    %269 = vmatprep.subr.bf16.mxu0 0
    %270 = vmatpush1.bf16.msra.mxu0 0
    %271 = vmatprep.subr.bf16.mxu0 0
    %272 = vmatpush1.bf16.msra.mxu0 0
    %273 = vmatprep.subr.bf16.mxu0 0
    %274 = vmatpush1.bf16.msra.mxu0 0
    %275 = vmatprep.subr.bf16.mxu0 0
    %276 = vmatpush1.bf16.msra.mxu0 0
    %277 = vmatprep.subr.bf16.mxu0 0
    %278 = vmatpush1.bf16.msra.mxu0 0
    %279 = vmatprep.subr.bf16.mxu0 0
    %280 = vmatpush1.bf16.msra.mxu0 0
    %281 = vmatprep.subr.bf16.mxu0 0
    %282 = vmatpush1.bf16.msra.mxu0 0
    %283 = vmatprep.subr.bf16.mxu0 0
    %284 = vmatpush1.bf16.msra.mxu0 0
    %285 = vmatprep.subr.bf16.mxu0 0
    %286 = vmatpush1.bf16.msra.mxu0 0
    %287 = vmatprep.subr.bf16.mxu0 0
    %288 = vmatpush1.bf16.msra.mxu0 0
    %289 = vmatprep.subr.bf16.mxu0 0
    %290 = vmatpush1.bf16.msra.mxu0 0
    %291 = vmatprep.mubr.bf16.mxu0 0
    %292 = vmatmul.mubr.bf16.gmra.mrb[0].mxu0 %v253
    %v293 = vpop.f32.mrb[0].mxu0
    %v294 = vadd.f32 %v240, %v293
    %v295 = vpop.f32.mrb[0].mxu0
    %v296 = vpop.f32.mrb[0].mxu0
    %v297 = vpop.f32.mrb[0].mxu0
    %298 = vdwg.mxu0
    %v299 = vmax.f32 %v294, 0.0
    %v300 = vpack.c.bf16 %v299, %v299
    %v301 = vld [vmem:[#allocation11] sm:$0xf]
    %v302 = vld [vmem:[#allocation11 + $0x4] sm:$0xf]
    %v303 = vld [vmem:[#allocation11 + $0x8] sm:$0xf]
    %v304 = vld [vmem:[#allocation11 + $0xc] sm:$0xf]
    %v305 = vld [vmem:[#allocation11 + $0x10] sm:$0xf]
    %v306 = vld [vmem:[#allocation11 + $0x14] sm:$0xf]
    %v307 = vld [vmem:[#allocation11 + $0x18] sm:$0xf]
    %v308 = vld [vmem:[#allocation11 + $0x1c] sm:$0xf]
    %v309 = vld [vmem:[#allocation11 + $0x20] sm:$0xf]
    %v310 = vld [vmem:[#allocation11 + $0x24] sm:$0xf]
    %v311 = vld [vmem:[#allocation11 + $0x28] sm:$0xf]
    %v312 = vld [vmem:[#allocation11 + $0x2c] sm:$0xf]
    %v313 = vld [vmem:[#allocation11 + $0x30] sm:$0xf]
    %v314 = vld [vmem:[#allocation11 + $0x34] sm:$0xf]
    %v315 = vld [vmem:[#allocation11 + $0x38] sm:$0xf]
    %v316 = vld [vmem:[#allocation11 + $0x3c] sm:$0xf]
    %v333 = vunpack.c.l.b16 %v301
    %v334 = vunpack.c.l.b16 %v302
    %v335 = vunpack.c.l.b16 %v303
    %v336 = vunpack.c.l.b16 %v304
    %v337 = vunpack.c.l.b16 %v305
    %v338 = vunpack.c.l.b16 %v306
    %v339 = vunpack.c.l.b16 %v307
    %v340 = vunpack.c.l.b16 %v308
    %v341 = vunpack.c.l.b16 %v309
    %v342 = vunpack.c.l.b16 %v310
    %v343 = vunpack.c.l.b16 %v311
    %v344 = vunpack.c.l.b16 %v312
    %v345 = vunpack.c.l.b16 %v313
    %v346 = vunpack.c.l.b16 %v314
    %v347 = vunpack.c.l.b16 %v315
    %v348 = vunpack.c.l.b16 %v316
    %v349 = vpack.c.b16 %v334, %v333
    %v350 = vpack.c.b16 %v336, %v335
    %v351 = vpack.c.b16 %v338, %v337
    %v352 = vpack.c.b16 %v340, %v339
    %v353 = vpack.c.b16 %v342, %v341
    %v354 = vpack.c.b16 %v344, %v343
    %v355 = vpack.c.b16 %v346, %v345
    %v356 = vpack.c.b16 %v348, %v347
    %365 = vmatprep.subr.bf16.mxu0 0
    %366 = vmatpush1.bf16.msra.mxu0 %v349
    %367 = vmatprep.subr.bf16.mxu0 0
    %368 = vmatpush1.bf16.msra.mxu0 %v350
    %369 = vmatprep.subr.bf16.mxu0 0
    %370 = vmatpush1.bf16.msra.mxu0 %v351
    %371 = vmatprep.subr.bf16.mxu0 0
    %372 = vmatpush1.bf16.msra.mxu0 %v352
    %373 = vmatprep.subr.bf16.mxu0 0
    %374 = vmatpush1.bf16.msra.mxu0 %v353
    %375 = vmatprep.subr.bf16.mxu0 0
    %376 = vmatpush1.bf16.msra.mxu0 %v354
    %377 = vmatprep.subr.bf16.mxu0 0
    %378 = vmatpush1.bf16.msra.mxu0 %v355
    %379 = vmatprep.subr.bf16.mxu0 0
    %380 = vmatpush1.bf16.msra.mxu0 %v356
    %381 = vmatprep.subr.bf16.mxu0 0
    %382 = vmatpush1.bf16.msra.mxu0 0
    %383 = vmatprep.subr.bf16.mxu0 0
    %384 = vmatpush1.bf16.msra.mxu0 0
    %385 = vmatprep.subr.bf16.mxu0 0
    %386 = vmatpush1.bf16.msra.mxu0 0
    %387 = vmatprep.subr.bf16.mxu0 0
    %388 = vmatpush1.bf16.msra.mxu0 0
    %389 = vmatprep.subr.bf16.mxu0 0
    %390 = vmatpush1.bf16.msra.mxu0 0
    %391 = vmatprep.subr.bf16.mxu0 0
    %392 = vmatpush1.bf16.msra.mxu0 0
    %393 = vmatprep.subr.bf16.mxu0 0
    %394 = vmatpush1.bf16.msra.mxu0 0
    %395 = vmatprep.subr.bf16.mxu0 0
    %396 = vmatpush1.bf16.msra.mxu0 0
    %397 = vmatprep.mubr.bf16.mxu0 0
    %398 = vmatmul.mubr.bf16.gmra.mrb[0].mxu0 %v300
    %v399 = vpop.f32.mrb[0].mxu0
    %v400 = vadd.f32 0.0, %v399
    %v401 = vpop.f32.mrb[0].mxu0
    %v402 = vpop.f32.mrb[0].mxu0
    %v403 = vpop.f32.mrb[0].mxu0
    %404 = vdwg.mxu0
    %v421 = vunpack.c.l.b16 %v214
    %v422 = vunpack.c.l.b16 %v215
    %v423 = vunpack.c.l.b16 %v216
    %v424 = vunpack.c.l.b16 %v217
    %v425 = vunpack.c.l.b16 %v218
    %v426 = vunpack.c.l.b16 %v219
    %v427 = vunpack.c.l.b16 %v220
    %v428 = vunpack.c.l.b16 %v221
    %v429 = vunpack.c.l.b16 %v222
    %v430 = vunpack.c.l.b16 %v223
    %v431 = vunpack.c.l.b16 %v224
    %v432 = vunpack.c.l.b16 %v225
    %v433 = vunpack.c.l.b16 %v226
    %v434 = vunpack.c.l.b16 %v227
    %v435 = vunpack.c.l.b16 %v228
    %v436 = vunpack.c.l.b16 %v229
    %v437 = vpack.c.b16 %v422, %v421
    %v438 = vpack.c.b16 %v424, %v423
    %v439 = vpack.c.b16 %v426, %v425
    %v440 = vpack.c.b16 %v428, %v427
    %v441 = vpack.c.b16 %v430, %v429
    %v442 = vpack.c.b16 %v432, %v431
    %v443 = vpack.c.b16 %v434, %v433
    %v444 = vpack.c.b16 %v436, %v435
    %453 = vmatprep.subr.bf16.mxu0 0
    %454 = vmatpush1.bf16.msra.mxu0 %v437
    %455 = vmatprep.subr.bf16.mxu0 0
    %456 = vmatpush1.bf16.msra.mxu0 %v438
    %457 = vmatprep.subr.bf16.mxu0 0
    %458 = vmatpush1.bf16.msra.mxu0 %v439
    %459 = vmatprep.subr.bf16.mxu0 0
    %460 = vmatpush1.bf16.msra.mxu0 %v440
    %461 = vmatprep.subr.bf16.mxu0 0
    %462 = vmatpush1.bf16.msra.mxu0 %v441
    %463 = vmatprep.subr.bf16.mxu0 0
    %464 = vmatpush1.bf16.msra.mxu0 %v442
    %465 = vmatprep.subr.bf16.mxu0 0
    %466 = vmatpush1.bf16.msra.mxu0 %v443
    %467 = vmatprep.subr.bf16.mxu0 0
    %468 = vmatpush1.bf16.msra.mxu0 %v444
    %469 = vmatprep.subr.bf16.mxu0 0
    %470 = vmatpush1.bf16.msra.mxu0 0
    %471 = vmatprep.subr.bf16.mxu0 0
    %472 = vmatpush1.bf16.msra.mxu0 0
    %473 = vmatprep.subr.bf16.mxu0 0
    %474 = vmatpush1.bf16.msra.mxu0 0
    %475 = vmatprep.subr.bf16.mxu0 0
    %476 = vmatpush1.bf16.msra.mxu0 0
    %477 = vmatprep.subr.bf16.mxu0 0
    %478 = vmatpush1.bf16.msra.mxu0 0
    %479 = vmatprep.subr.bf16.mxu0 0
    %480 = vmatpush1.bf16.msra.mxu0 0
    %481 = vmatprep.subr.bf16.mxu0 0
    %482 = vmatpush1.bf16.msra.mxu0 0
    %483 = vmatprep.subr.bf16.mxu0 0
    %484 = vmatpush1.bf16.msra.mxu0 0
    %485 = vmatprep.mubr.bf16.mxu0 0
    %486 = vmatmul.mubr.bf16.gmra.mrb[0].mxu0 %v213
    %v487 = vpop.f32.mrb[0].mxu0
    %v488 = vadd.f32 %v400, %v487
    %v489 = vpop.f32.mrb[0].mxu0
    %v490 = vpop.f32.mrb[0].mxu0
    %v491 = vpop.f32.mrb[0].mxu0
    %492 = vdwg.mxu0
    %v493 = vld [vmem:[%s8] sm:$0x1]
    %v495 = vlaneseq
    %v496 = vshrl.u32 %v495, 7
    %v497 = vsub.s32 0, %v496
    %v498 = vrot.slane %v493, %v497
    %v500 = vadd.f32 %v488, %v498
    %v501 = vmax.f32 %v500, 0.0
    %v502 = vpack.c.bf16 %v501, %v501
    %v503 = vld [vmem:[#allocation13] sm:$0xf]
    %v504 = vld [vmem:[#allocation13 + $0x4] sm:$0xf]
    %v505 = vld [vmem:[#allocation13 + $0x8] sm:$0xf]
    %v506 = vld [vmem:[#allocation13 + $0xc] sm:$0xf]
    %v507 = vld [vmem:[#allocation13 + $0x10] sm:$0xf]
    %v508 = vld [vmem:[#allocation13 + $0x14] sm:$0xf]
    %v509 = vld [vmem:[#allocation13 + $0x18] sm:$0xf]
    %v510 = vld [vmem:[#allocation13 + $0x1c] sm:$0xf]
    %v511 = vld [vmem:[#allocation13 + $0x20] sm:$0xf]
    %v512 = vld [vmem:[#allocation13 + $0x24] sm:$0xf]
    %v513 = vld [vmem:[#allocation13 + $0x28] sm:$0xf]
    %v514 = vld [vmem:[#allocation13 + $0x2c] sm:$0xf]
    %v515 = vld [vmem:[#allocation13 + $0x30] sm:$0xf]
    %v516 = vld [vmem:[#allocation13 + $0x34] sm:$0xf]
    %v517 = vld [vmem:[#allocation13 + $0x38] sm:$0xf]
    %v518 = vld [vmem:[#allocation13 + $0x3c] sm:$0xf]
    %v519 = vld [vmem:[%s10] sm:$0x1]
    %v521 = vlaneseq
    %v522 = vshrl.u32 %v521, 7
    %v523 = vsub.s32 0, %v522
    %v524 = vrot.slane %v519, %v523
    %v542 = vunpack.c.l.b16 %v503
    %v543 = vunpack.c.l.b16 %v504
    %v544 = vunpack.c.l.b16 %v505
    %v545 = vunpack.c.l.b16 %v506
    %v546 = vunpack.c.l.b16 %v507
    %v547 = vunpack.c.l.b16 %v508
    %v548 = vunpack.c.l.b16 %v509
    %v549 = vunpack.c.l.b16 %v510
    %v550 = vunpack.c.l.b16 %v511
    %v551 = vunpack.c.l.b16 %v512
    %v552 = vunpack.c.l.b16 %v513
    %v553 = vunpack.c.l.b16 %v514
    %v554 = vunpack.c.l.b16 %v515
    %v555 = vunpack.c.l.b16 %v516
    %v556 = vunpack.c.l.b16 %v517
    %v557 = vunpack.c.l.b16 %v518
    %v558 = vpack.c.b16 %v543, %v542
    %v559 = vpack.c.b16 %v545, %v544
    %v560 = vpack.c.b16 %v547, %v546
    %v561 = vpack.c.b16 %v549, %v548
    %v562 = vpack.c.b16 %v551, %v550
    %v563 = vpack.c.b16 %v553, %v552
    %v564 = vpack.c.b16 %v555, %v554
    %v565 = vpack.c.b16 %v557, %v556
    %574 = vmatprep.subr.bf16.mxu0 0
    %575 = vmatpush1.bf16.msra.mxu0 %v558
    %576 = vmatprep.subr.bf16.mxu0 0
    %577 = vmatpush1.bf16.msra.mxu0 %v559
    %578 = vmatprep.subr.bf16.mxu0 0
    %579 = vmatpush1.bf16.msra.mxu0 %v560
    %580 = vmatprep.subr.bf16.mxu0 0
    %581 = vmatpush1.bf16.msra.mxu0 %v561
    %582 = vmatprep.subr.bf16.mxu0 0
    %583 = vmatpush1.bf16.msra.mxu0 %v562
    %584 = vmatprep.subr.bf16.mxu0 0
    %585 = vmatpush1.bf16.msra.mxu0 %v563
    %586 = vmatprep.subr.bf16.mxu0 0
    %587 = vmatpush1.bf16.msra.mxu0 %v564
    %588 = vmatprep.subr.bf16.mxu0 0
    %589 = vmatpush1.bf16.msra.mxu0 %v565
    %590 = vmatprep.subr.bf16.mxu0 0
    %591 = vmatpush1.bf16.msra.mxu0 0
    %592 = vmatprep.subr.bf16.mxu0 0
    %593 = vmatpush1.bf16.msra.mxu0 0
    %594 = vmatprep.subr.bf16.mxu0 0
    %595 = vmatpush1.bf16.msra.mxu0 0
    %596 = vmatprep.subr.bf16.mxu0 0
    %597 = vmatpush1.bf16.msra.mxu0 0
    %598 = vmatprep.subr.bf16.mxu0 0
    %599 = vmatpush1.bf16.msra.mxu0 0
    %600 = vmatprep.subr.bf16.mxu0 0
    %601 = vmatpush1.bf16.msra.mxu0 0
    %602 = vmatprep.subr.bf16.mxu0 0
    %603 = vmatpush1.bf16.msra.mxu0 0
    %604 = vmatprep.subr.bf16.mxu0 0
    %605 = vmatpush1.bf16.msra.mxu0 0
    %606 = vmatprep.mubr.bf16.mxu0 0
    %607 = vmatmul.mubr.bf16.gmra.mrb[0].mxu0 %v502
    %v608 = vpop.f32.mrb[0].mxu0
    %v609 = vadd.f32 %v524, %v608
    %v610 = vpop.f32.mrb[0].mxu0
    %v611 = vpop.f32.mrb[0].mxu0
    %v612 = vpop.f32.mrb[0].mxu0
    %613 = vdwg.mxu0
    %v614 = vld [vmem:[#allocation14] sm:$0xff]
    %v615 = vld [vmem:[#allocation14 + $0x8] sm:$0xff]
    %v616 = vld [vmem:[#allocation14 + $0x10] sm:$0xff]
    %v617 = vld [vmem:[#allocation14 + $0x18] sm:$0xff]
    %v618 = vld [vmem:[#allocation14 + $0x20] sm:$0xff]
    %v619 = vld [vmem:[#allocation14 + $0x28] sm:$0xff]
    %v620 = vld [vmem:[#allocation14 + $0x30] sm:$0xff]
    %v621 = vld [vmem:[#allocation14 + $0x38] sm:$0xff]
    %v622 = vld [vmem:[#allocation14 + $0x40] sm:$0xff]
    %v623 = vld [vmem:[#allocation14 + $0x48] sm:$0xff]
    %v624 = vld [vmem:[#allocation14 + $0x50] sm:$0xff]
    %v625 = vld [vmem:[#allocation14 + $0x58] sm:$0xff]
    %v626 = vld [vmem:[#allocation14 + $0x60] sm:$0xff]
    %v627 = vld [vmem:[#allocation14 + $0x68] sm:$0xff]
    %v628 = vld [vmem:[#allocation14 + $0x70] sm:$0xff]
    %v629 = vld [vmem:[#allocation14 + $0x78] sm:$0xff]
    %v630 = vmul.f32 %v609, %v609
    %631 = vadd.xlane.f32.xlu0 %v630
    %v632 = vpop.xlane.xlu0 %631
    %633 = vmatprep.subr.mxu0 0.0
    %634 = vmatpush1.xpose.msra.mxu0 %v614
    %635 = vmatprep.subr.mxu0 0.0
    %636 = vmatpush1.xpose.msra.mxu0 %v615
    %637 = vmatprep.subr.mxu0 0.0
    %638 = vmatpush1.xpose.msra.mxu0 %v616
    %639 = vmatprep.subr.mxu0 0.0
    %640 = vmatpush1.xpose.msra.mxu0 %v617
    %641 = vmatprep.subr.mxu0 0.0
    %642 = vmatpush1.xpose.msra.mxu0 %v618
    %643 = vmatprep.subr.mxu0 0.0
    %644 = vmatpush1.xpose.msra.mxu0 %v619
    %645 = vmatprep.subr.mxu0 0.0
    %646 = vmatpush1.xpose.msra.mxu0 %v620
    %647 = vmatprep.subr.mxu0 0.0
    %648 = vmatpush1.xpose.msra.mxu0 %v621
    %649 = vmatprep.subr.mxu0 0.0
    %650 = vmatpush1.xpose.msra.mxu0 %v622
    %651 = vmatprep.subr.mxu0 0.0
    %652 = vmatpush1.xpose.msra.mxu0 %v623
    %653 = vmatprep.subr.mxu0 0.0
    %654 = vmatpush1.xpose.msra.mxu0 %v624
    %655 = vmatprep.subr.mxu0 0.0
    %656 = vmatpush1.xpose.msra.mxu0 %v625
    %657 = vmatprep.subr.mxu0 0.0
    %658 = vmatpush1.xpose.msra.mxu0 %v626
    %659 = vmatprep.subr.mxu0 0.0
    %660 = vmatpush1.xpose.msra.mxu0 %v627
    %661 = vmatprep.subr.mxu0 0.0
    %662 = vmatpush1.xpose.msra.mxu0 %v628
    %663 = vmatprep.subr.mxu0 0.0
    %664 = vmatpush1.xpose.msra.mxu0 %v629
    %665 = vmatprep.subr.mxu0 0.0
    %666 = vmatpush1.xpose.msra.mxu0 0.0
    %667 = vmatprep.subr.mxu0 0.0
    %668 = vmatpush1.xpose.msra.mxu0 0.0
    %669 = vmatprep.subr.mxu0 0.0
    %670 = vmatpush1.xpose.msra.mxu0 0.0
    %671 = vmatprep.subr.mxu0 0.0
    %672 = vmatpush1.xpose.msra.mxu0 0.0
    %673 = vmatprep.subr.mxu0 0.0
    %674 = vmatpush1.xpose.msra.mxu0 0.0
    %675 = vmatprep.subr.mxu0 0.0
    %676 = vmatpush1.xpose.msra.mxu0 0.0
    %677 = vmatprep.subr.mxu0 0.0
    %678 = vmatpush1.xpose.msra.mxu0 0.0
    %679 = vmatprep.subr.mxu0 0.0
    %680 = vmatpush1.xpose.msra.mxu0 0.0
    %681 = vmatprep.subr.mxu0 0.0
    %682 = vmatpush1.xpose.msra.mxu0 0.0
    %683 = vmatprep.subr.mxu0 0.0
    %684 = vmatpush1.xpose.msra.mxu0 0.0
    %685 = vmatprep.subr.mxu0 0.0
    %686 = vmatpush1.xpose.msra.mxu0 0.0
    %687 = vmatprep.subr.mxu0 0.0
    %688 = vmatpush1.xpose.msra.mxu0 0.0
    %689 = vmatprep.subr.mxu0 0.0
    %690 = vmatpush1.xpose.msra.mxu0 0.0
    %691 = vmatprep.subr.mxu0 0.0
    %692 = vmatpush1.xpose.msra.mxu0 0.0
    %693 = vmatprep.subr.mxu0 0.0
    %694 = vmatpush1.xpose.msra.mxu0 0.0
    %695 = vmatprep.subr.mxu0 0.0
    %696 = vmatpush1.xpose.msra.mxu0 0.0
    %697 = vmatprep.mubr.f32.mxu0 0.0
    %698 = vmatmul.mubr.f32.gmra.mrb[0].mxu0 %v609
    %v699 = vpop.f32.mrb[0].mxu0
    %v700 = vadd.f32 0.0, %v699
    %v701 = vpop.f32.mrb[0].mxu0
    %702 = vdwg.mxu0
    %v703 = vld [vmem:[%s12] sm:$0x1]
    %v705 = vlaneseq
    %v706 = vshrl.u32 %v705, 7
    %v707 = vsub.s32 0, %v706
    %v708 = vrot.slane %v703, %v707
    %v710 = vadd.f32 %v632, %v708
    %v711 = vmul.f32 %v700, 2.0
    %v712 = vsub.f32 %v710, %v711
    %v713 = vmax.f32 %v712, 0.0
    %v714 = vadd.f32 %v713, 1.0
    %v715 = vrcp.pop %v714
    %v716 = vlaneseq
    %v717 = vand.u32 %v716, 127
    %vm718 = vcmp.lt.s32.totalorder %v717, 4
    %v719 = vsel %vm718, %v715, 0.0
    %720 = vadd.xlane.f32.xlu0 %v719
    %v721 = vpop.xlane.xlu0 %720
    %v722 = vrcp.pop %v721
    %v723 = vmul.f32 %v719, %v722
    %724 = vst [vmem:[#allocation16] sm:$0xff] %v723
    // Predicated region
    $region86: #{tpu_custom_call.1} parent=1 // pred_check
      _
    $region87: #{tpu_custom_call.1} parent=1 // pred_check_branch
      %726 = sbr.rel (0) target = $region89
    $region88: #{tpu_custom_call.1} parent=1 // pred_region
      %s728 = ssub.s32 128, 128
      %729 = vsyncadd [#allocation4], %s728
      %s731 = sshll.u32 [#allocation16], 4
      %s732 = int_to_ptr.vmem [resolvable:$true] %s731
      %734 = dma.vmem_to_hbm [thread:$0]  %s732, 128, %s13, [#allocation4]
    $region89: #{tpu_custom_call.1} parent=1 // pred_fallthru
      _
    // Predicated region
    $region90: #{tpu_custom_call.1} parent=1 // pred_check
      _
    $region91: #{tpu_custom_call.1} parent=1 // pred_check_branch
      %736 = sbr.rel (0) target = $region93
    $region92: #{tpu_custom_call.1} parent=1 // pred_region
      %737 = dma.done [#allocation4], 128
    $region93: #{tpu_custom_call.1} parent=1 // pred_fallthru
      _
    %738 = vsyncpa [#allocation3], 1
    %739 = vsyncpa [#allocation6], 1
    %740 = vsyncpa [#allocation9], 1
    %741 = vsyncpa [#allocation12], 1
    %742 = vsyncpa [#allocation15], 1
    %743 = vsyncpa [#allocation4], 1

</llo_original>
